<compile_context>
chip_gen: v5e
topology: v5e:2x2
jax: 0.10.0
libtpu: 0.0.40
codegen_flags: <defaults>
</compile_context>

<pallas_src>
import functools

import jax
import jax.numpy as jnp
from jax.experimental import pallas as pl
from jax.experimental.pallas import tpu as pltpu


def _dwsep_same_kernel(x_ref, wdw_ref, wpw_ref, bpw_ref, o_ref, *,
                       K, padding, H, W, CIN, COUT):
    """'Same' fast path: stride=1 and 2*padding == K-1, so HO=H, WO=W.

    x_ref  : (1, CIN, H*W)    input, flat spatial on the lane axis
    wdw_ref: (K*K, CIN, 1)    depthwise weight columns (one per tap)
    wpw_ref: (CIN, COUT, 1)   pointwise weight columns (one per input chan)
    bpw_ref: (COUT, 1)        effective pointwise bias (dw bias folded in)
    o_ref  : (1, COUT, H*W)   output, flat spatial on the lane axis
    """
    HW = H * W
    x = x_ref[0].astype(jnp.float32)                       # (CIN, HW)

    # Static border masks: q = flat output index, col = column index (hoisted).
    q = jax.lax.broadcasted_iota(jnp.int32, (1, HW), 1)
    if W & (W - 1) == 0:
        col = q & (W - 1)                                  # W power of two
    else:
        col = q - W * jnp.floor(q.astype(jnp.float32) / W).astype(jnp.int32)

    # Depthwise KxK: all CIN channels per tap in one vector pass; each tap is
    # a lane rotation (XLU) + border mask instead of a padded-VMEM re-read.
    dw = jnp.zeros((CIN, HW), jnp.float32)
    for ky in range(K):
        dy = ky - padding
        for kx in range(K):
            dx = kx - padding
            s = dy * W + dx                                # flat source offset
            v = x if s == 0 else pltpu.roll(x, shift=(-s) % HW, axis=1)
            mask = None
            if dy > 0:
                mask = q < (H - dy) * W
            elif dy < 0:
                mask = q >= (-dy) * W
            if dx > 0:
                m = col < (W - dx)
                mask = m if mask is None else jnp.logical_and(mask, m)
            elif dx < 0:
                m = col >= (-dx)
                mask = m if mask is None else jnp.logical_and(mask, m)
            if mask is not None:
                v = jnp.where(mask, v, 0.0)
            dw = dw + v * wdw_ref[ky * K + kx]             # (CIN,HW)*(CIN,1)

    # Fused pointwise 1x1: COUT running rows, outer-product VPU FMAs.
    # TODO(synk): move this contraction to the MXU once CIN/COUT >= ~32.
    out = jnp.zeros((COUT, HW), jnp.float32) + bpw_ref[...]
    for c in range(CIN):
        out = out + dw[c:c + 1, :] * wpw_ref[c]            # (1,HW)*(COUT,1)
    o_ref[0] = out.astype(o_ref.dtype)


def _dwsep_general_kernel(x_ref, wdw_ref, bdw_ref, wpw_ref, bpw_ref, o_ref,
                          xpad_ref, *, K, stride, padding, H, W, HO, WO,
                          CIN, COUT):
    """Fallback for arbitrary stride / padding. One batch element per step.

    x_ref  : (1, CIN, H, W)      input (NCHW, unpadded)
    wdw_ref: (CIN*K*K,)  f32     depthwise weights      (SMEM scalars)
    bdw_ref: (CIN,)      f32     depthwise bias         (SMEM scalars)
    wpw_ref: (COUT*CIN,) f32     pointwise 1x1 weights  (SMEM scalars)
    bpw_ref: (COUT,)     f32     pointwise bias         (SMEM scalars)
    o_ref  : (1, COUT, HO, WO)   output (NCHW)
    xpad_ref: (CIN, Hp, Wp) f32  zero-padded input scratch
    """
    Hp, Wp = H + 2 * padding, W + 2 * padding
    H1, W1 = Hp - K + 1, Wp - K + 1              # stride-1 depthwise extent

    # Halo build: one all-channel interior store (was CIN masked sub-stores).
    if padding > 0:
        xpad_ref[...] = jnp.zeros_like(xpad_ref)
        xpad_ref[:, padding:padding + H, padding:padding + W] = (
            x_ref[0].astype(jnp.float32))
    else:
        xpad_ref[...] = x_ref[0].astype(jnp.float32)

    # Fused depthwise + pointwise: per input channel compute its depthwise map
    # once and immediately scatter it into the COUT running outputs.
    outs = [jnp.zeros((HO, WO), jnp.float32) + bpw_ref[co]
            for co in range(COUT)]
    for c in range(CIN):
        acc = jnp.zeros((H1, W1), jnp.float32)
        for ky in range(K):
            for kx in range(K):
                w = wdw_ref[c * K * K + ky * K + kx]        # SMEM scalar
                acc = acc + xpad_ref[c, ky:ky + H1, kx:kx + W1] * w
        if stride > 1:
            # TODO(synk): compute only the strided rows/cols (strided DMA /
            # index_map) instead of subsampling the dense result in-register.
            acc = acc[::stride, ::stride]
        acc = acc + bdw_ref[c]
        for co in range(COUT):
            outs[co] = outs[co] + acc * wpw_ref[co * CIN + c]
    for co in range(COUT):
        o_ref[0, co] = outs[co].astype(o_ref.dtype)


def depthwise_conv2d_pallas(x_nchw, w_dw, b_dw, w_pw, b_pw, *, kernel_size,
                            padding=0, stride=1):
    """Equivalent of DepthWiseConv2d(dim_in, dim_out, kernel_size, padding, stride).

    x_nchw: (N, Cin, H, W); w_dw: (Cin,1,K,K); b_dw: (Cin,);
    w_pw: (Cout,Cin,1,1); b_pw: (Cout,).  Returns (N, Cout, Ho, Wo) NCHW.
    """
    N, CIN, H, W = x_nchw.shape
    COUT = w_pw.shape[0]
    K = kernel_size
    HO = (H + 2 * padding - K) // stride + 1
    WO = (W + 2 * padding - K) // stride + 1

    compiler_params = pltpu.CompilerParams(
        dimension_semantics=("parallel",),      # batch across v7x's 2 TCs
        vmem_limit_bytes=32 * 1024 * 1024,      # well under v7x's 64 MiB/TC
    )

    if stride == 1 and 2 * padding == K - 1:
        # "Same" fast path: lane-dense flat spatial layout, no halo scratch.
        HW = H * W
        x_flat = x_nchw.reshape(N, CIN, HW)                 # free reshape
        wdw_cols = (w_dw[:, 0, :, :].reshape(CIN, K * K).T
                    .reshape(K * K, CIN, 1).astype(jnp.float32))
        wpw_mat = w_pw[:, :, 0, 0].astype(jnp.float32)      # (COUT, CIN)
        wpw_cols = wpw_mat.T.reshape(CIN, COUT, 1)
        bpw_eff = (b_pw.astype(jnp.float32)
                   + wpw_mat @ b_dw.astype(jnp.float32)).reshape(COUT, 1)

        kernel = functools.partial(_dwsep_same_kernel, K=K, padding=padding,
                                   H=H, W=W, CIN=CIN, COUT=COUT)
        out_flat = pl.pallas_call(
            kernel,
            out_shape=jax.ShapeDtypeStruct((N, COUT, HW), x_nchw.dtype),
            grid_spec=pltpu.PrefetchScalarGridSpec(
                num_scalar_prefetch=0,
                grid=(N,),
                in_specs=[
                    pl.BlockSpec((1, CIN, HW), lambda n: (n, 0, 0)),
                    pl.BlockSpec((K * K, CIN, 1), lambda n: (0, 0, 0)),
                    pl.BlockSpec((CIN, COUT, 1), lambda n: (0, 0, 0)),
                    pl.BlockSpec((COUT, 1), lambda n: (0, 0)),
                ],
                out_specs=pl.BlockSpec((1, COUT, HW), lambda n: (n, 0, 0)),
            ),
            compiler_params=compiler_params,
        )(x_flat, wdw_cols, wpw_cols, bpw_eff)
        return out_flat.reshape(N, COUT, HO, WO)            # free reshape

    # General fallback: arbitrary stride / padding, halo scratch in VMEM.
    Hp, Wp = H + 2 * padding, W + 2 * padding
    wdw_flat = w_dw[:, 0, :, :].reshape(CIN * K * K).astype(jnp.float32)
    wpw_flat = w_pw[:, :, 0, 0].reshape(COUT * CIN).astype(jnp.float32)
    bdw_flat = b_dw.astype(jnp.float32)
    bpw_flat = b_pw.astype(jnp.float32)
    kernel = functools.partial(_dwsep_general_kernel, K=K, stride=stride,
                               padding=padding, H=H, W=W, HO=HO, WO=WO,
                               CIN=CIN, COUT=COUT)
    smem_spec = pl.BlockSpec(memory_space=pltpu.MemorySpace.SMEM)
    return pl.pallas_call(
        kernel,
        out_shape=jax.ShapeDtypeStruct((N, COUT, HO, WO), x_nchw.dtype),
        grid_spec=pltpu.PrefetchScalarGridSpec(
            num_scalar_prefetch=0,
            grid=(N,),
            in_specs=[
                pl.BlockSpec((1, CIN, H, W), lambda n: (n, 0, 0, 0)),
                smem_spec, smem_spec, smem_spec, smem_spec,
            ],
            out_specs=pl.BlockSpec((1, COUT, HO, WO), lambda n: (n, 0, 0, 0)),
            scratch_shapes=[pltpu.VMEM((CIN, Hp, Wp), jnp.float32)],
        ),
        compiler_params=compiler_params,
    )(x_nchw, wdw_flat, bdw_flat, wpw_flat, bpw_flat)


def _reference(x, w_dw, b_dw, w_pw, b_pw, *, padding, stride):
    """Pure-JAX reference matching nn.Conv2d(groups=Cin) -> nn.Conv2d(1x1)."""
    y = jax.lax.conv_general_dilated(
        x, w_dw, window_strides=(stride, stride),
        padding=[(padding, padding), (padding, padding)],
        dimension_numbers=("NCHW", "OIHW", "NCHW"),
        feature_group_count=x.shape[1])
    y = y + b_dw[None, :, None, None]
    z = jax.lax.conv_general_dilated(
        y, w_pw, window_strides=(1, 1), padding="VALID",
        dimension_numbers=("NCHW", "OIHW", "NCHW"))
    z = z + b_pw[None, :, None, None]
    return z


if __name__ == "__main__":
    # Module hyperparameters (small, consistent with the PyTorch module).
    N, DIM_IN, H, W = 2, 4, 16, 16
    DIM_OUT = 8
    KERNEL_SIZE, PADDING, STRIDE = 3, 1, 1

    key = jax.random.PRNGKey(0)
    kx, k1, k2, k3, k4 = jax.random.split(key, 5)

    x = jax.random.normal(kx, (N, DIM_IN, H, W), dtype=jnp.float32)
    w_dw = jax.random.normal(k1, (DIM_IN, 1, KERNEL_SIZE, KERNEL_SIZE),
                             dtype=jnp.float32) * 0.1
    b_dw = jax.random.normal(k2, (DIM_IN,), dtype=jnp.float32) * 0.1
    w_pw = jax.random.normal(k3, (DIM_OUT, DIM_IN, 1, 1), dtype=jnp.float32) * 0.1
    b_pw = jax.random.normal(k4, (DIM_OUT,), dtype=jnp.float32) * 0.1

    out = depthwise_conv2d_pallas(x, w_dw, b_dw, w_pw, b_pw,
                                  kernel_size=KERNEL_SIZE,
                                  padding=PADDING, stride=STRIDE)
    out = jax.block_until_ready(out)

    ref = _reference(x, w_dw, b_dw, w_pw, b_pw, padding=PADDING, stride=STRIDE)
    ref = jax.block_until_ready(ref)

    HO = (H + 2 * PADDING - KERNEL_SIZE) // STRIDE + 1
    WO = (W + 2 * PADDING - KERNEL_SIZE) // STRIDE + 1
    assert out.shape == (N, DIM_OUT, HO, WO), out.shape
    assert jnp.allclose(out, ref, rtol=1e-5, atol=1e-5), (
        float(jnp.max(jnp.abs(out - ref))))
    print("KERNEL_OK")
</pallas_src>

<mosaic_0001>
module attributes {stable_mosaic.version = 11 : i64} {
  func.func @_dwsep_same_kernel(%arg0: i32, %arg1: memref<1x4x256xf32, #tpu.memory_space<vmem>>, %arg2: memref<9x4x1xf32, #tpu.memory_space<vmem>>, %arg3: memref<4x8x1xf32, #tpu.memory_space<vmem>>, %arg4: memref<8x1xf32, #tpu.memory_space<vmem>>, %arg5: memref<1x8x256xf32, #tpu.memory_space<vmem>>) attributes {dimension_semantics = [#tpu.dimension_semantics<parallel>], iteration_bounds = array<i64: 2>, scalar_prefetch = 0 : i64, scratch_operands = 0 : i64, tpu.core_type = #tpu.core_type<tc>, window_params = [{transform_indices = @transform_0, window_bounds = array<i64: 1, 4, 256>}, {pipeline_mode = #tpu.pipeline_mode<synchronous>, transform_indices = @transform_1, window_bounds = array<i64: 9, 4, 1>}, {pipeline_mode = #tpu.pipeline_mode<synchronous>, transform_indices = @transform_2, window_bounds = array<i64: 4, 8, 1>}, {pipeline_mode = #tpu.pipeline_mode<synchronous>, transform_indices = @transform_3, window_bounds = array<i64: 8, 1>}, {transform_indices = @transform_4, window_bounds = array<i64: 1, 8, 256>}]} {
    %c0 = arith.constant 0 : index
    %c0_0 = arith.constant 0 : index
    %c0_1 = arith.constant 0 : index
    %0 = vector.load %arg1[%c0, %c0_0, %c0_1] : memref<1x4x256xf32, #tpu.memory_space<vmem>>, vector<1x4x256xf32>
    %1 = vector.shape_cast %0 : vector<1x4x256xf32> to vector<4x256xf32>
    %2 = tpu.iota {dimensions = array<i32: 1>} : vector<1x256xi32>
    %c15_i32 = arith.constant 15 : i32
    %3 = vector.broadcast %c15_i32 : i32 to vector<1x256xi32>
    %4 = arith.andi %2, %3 : vector<1x256xi32>
    %cst = arith.constant 0.000000e+00 : f32
    %5 = vector.broadcast %cst : f32 to vector<4x256xf32>
    %c17_i32 = arith.constant 17 : i32
    %6 = tpu.dynamic_rotate %1 by %c17_i32 dim 1 : vector<4x256xf32>, i32 -> vector<4x256xf32>
    %c16_i32 = arith.constant 16 : i32
    %7 = vector.broadcast %c16_i32 : i32 to vector<1x256xi32>
    %8 = arith.cmpi sge, %2, %7 : vector<1x256xi32>
    %c1_i32 = arith.constant 1 : i32
    %9 = vector.broadcast %c1_i32 : i32 to vector<1x256xi32>
    %10 = arith.cmpi sge, %4, %9 : vector<1x256xi32>
    %11 = arith.andi %8, %10 : vector<1x256xi1>
    %cst_2 = arith.constant 0.000000e+00 : f32
    %12 = vector.shape_cast %11 : vector<1x256xi1> to vector<1x256xi1>
    %13 = vector.broadcast %12 : vector<1x256xi1> to vector<4x256xi1>
    %14 = vector.broadcast %cst_2 : f32 to vector<4x256xf32>
    %15 = arith.select %13, %6, %14 : vector<4x256xi1>, vector<4x256xf32>
    %c0_3 = arith.constant 0 : index
    %c0_4 = arith.constant 0 : index
    %c0_5 = arith.constant 0 : index
    %16 = vector.load %arg2[%c0_3, %c0_4, %c0_5] : memref<9x4x1xf32, #tpu.memory_space<vmem>>, vector<1x4x1xf32>
    %17 = vector.shape_cast %16 : vector<1x4x1xf32> to vector<4x1xf32>
    %18 = vector.broadcast %17 : vector<4x1xf32> to vector<4x256xf32>
    %19 = arith.mulf %15, %18 : vector<4x256xf32>
    %20 = arith.addf %5, %19 : vector<4x256xf32>
    %c16_i32_6 = arith.constant 16 : i32
    %21 = tpu.dynamic_rotate %1 by %c16_i32_6 dim 1 : vector<4x256xf32>, i32 -> vector<4x256xf32>
    %c16_i32_7 = arith.constant 16 : i32
    %22 = vector.broadcast %c16_i32_7 : i32 to vector<1x256xi32>
    %23 = arith.cmpi sge, %2, %22 : vector<1x256xi32>
    %cst_8 = arith.constant 0.000000e+00 : f32
    %24 = vector.shape_cast %23 : vector<1x256xi1> to vector<1x256xi1>
    %25 = vector.broadcast %24 : vector<1x256xi1> to vector<4x256xi1>
    %26 = vector.broadcast %cst_8 : f32 to vector<4x256xf32>
    %27 = arith.select %25, %21, %26 : vector<4x256xi1>, vector<4x256xf32>
    %c1 = arith.constant 1 : index
    %c0_9 = arith.constant 0 : index
    %c0_10 = arith.constant 0 : index
    %28 = vector.load %arg2[%c1, %c0_9, %c0_10] : memref<9x4x1xf32, #tpu.memory_space<vmem>>, vector<1x4x1xf32>
    %29 = vector.shape_cast %28 : vector<1x4x1xf32> to vector<4x1xf32>
    %30 = vector.broadcast %29 : vector<4x1xf32> to vector<4x256xf32>
    %31 = arith.mulf %27, %30 : vector<4x256xf32>
    %32 = arith.addf %20, %31 : vector<4x256xf32>
    %c15_i32_11 = arith.constant 15 : i32
    %33 = tpu.dynamic_rotate %1 by %c15_i32_11 dim 1 : vector<4x256xf32>, i32 -> vector<4x256xf32>
    %c16_i32_12 = arith.constant 16 : i32
    %34 = vector.broadcast %c16_i32_12 : i32 to vector<1x256xi32>
    %35 = arith.cmpi sge, %2, %34 : vector<1x256xi32>
    %c15_i32_13 = arith.constant 15 : i32
    %36 = vector.broadcast %c15_i32_13 : i32 to vector<1x256xi32>
    %37 = arith.cmpi slt, %4, %36 : vector<1x256xi32>
    %38 = arith.andi %35, %37 : vector<1x256xi1>
    %cst_14 = arith.constant 0.000000e+00 : f32
    %39 = vector.shape_cast %38 : vector<1x256xi1> to vector<1x256xi1>
    %40 = vector.broadcast %39 : vector<1x256xi1> to vector<4x256xi1>
    %41 = vector.broadcast %cst_14 : f32 to vector<4x256xf32>
    %42 = arith.select %40, %33, %41 : vector<4x256xi1>, vector<4x256xf32>
    %c2 = arith.constant 2 : index
    %c0_15 = arith.constant 0 : index
    %c0_16 = arith.constant 0 : index
    %43 = vector.load %arg2[%c2, %c0_15, %c0_16] : memref<9x4x1xf32, #tpu.memory_space<vmem>>, vector<1x4x1xf32>
    %44 = vector.shape_cast %43 : vector<1x4x1xf32> to vector<4x1xf32>
    %45 = vector.broadcast %44 : vector<4x1xf32> to vector<4x256xf32>
    %46 = arith.mulf %42, %45 : vector<4x256xf32>
    %47 = arith.addf %32, %46 : vector<4x256xf32>
    %c1_i32_17 = arith.constant 1 : i32
    %48 = tpu.dynamic_rotate %1 by %c1_i32_17 dim 1 : vector<4x256xf32>, i32 -> vector<4x256xf32>
    %c1_i32_18 = arith.constant 1 : i32
    %49 = vector.broadcast %c1_i32_18 : i32 to vector<1x256xi32>
    %50 = arith.cmpi sge, %4, %49 : vector<1x256xi32>
    %cst_19 = arith.constant 0.000000e+00 : f32
    %51 = vector.shape_cast %50 : vector<1x256xi1> to vector<1x256xi1>
    %52 = vector.broadcast %51 : vector<1x256xi1> to vector<4x256xi1>
    %53 = vector.broadcast %cst_19 : f32 to vector<4x256xf32>
    %54 = arith.select %52, %48, %53 : vector<4x256xi1>, vector<4x256xf32>
    %c3 = arith.constant 3 : index
    %c0_20 = arith.constant 0 : index
    %c0_21 = arith.constant 0 : index
    %55 = vector.load %arg2[%c3, %c0_20, %c0_21] : memref<9x4x1xf32, #tpu.memory_space<vmem>>, vector<1x4x1xf32>
    %56 = vector.shape_cast %55 : vector<1x4x1xf32> to vector<4x1xf32>
    %57 = vector.broadcast %56 : vector<4x1xf32> to vector<4x256xf32>
    %58 = arith.mulf %54, %57 : vector<4x256xf32>
    %59 = arith.addf %47, %58 : vector<4x256xf32>
    %c4 = arith.constant 4 : index
    %c0_22 = arith.constant 0 : index
    %c0_23 = arith.constant 0 : index
    %60 = vector.load %arg2[%c4, %c0_22, %c0_23] : memref<9x4x1xf32, #tpu.memory_space<vmem>>, vector<1x4x1xf32>
    %61 = vector.shape_cast %60 : vector<1x4x1xf32> to vector<4x1xf32>
    %62 = vector.broadcast %61 : vector<4x1xf32> to vector<4x256xf32>
    %63 = arith.mulf %1, %62 : vector<4x256xf32>
    %64 = arith.addf %59, %63 : vector<4x256xf32>
    %c255_i32 = arith.constant 255 : i32
    %65 = tpu.dynamic_rotate %1 by %c255_i32 dim 1 : vector<4x256xf32>, i32 -> vector<4x256xf32>
    %c15_i32_24 = arith.constant 15 : i32
    %66 = vector.broadcast %c15_i32_24 : i32 to vector<1x256xi32>
    %67 = arith.cmpi slt, %4, %66 : vector<1x256xi32>
    %cst_25 = arith.constant 0.000000e+00 : f32
    %68 = vector.shape_cast %67 : vector<1x256xi1> to vector<1x256xi1>
    %69 = vector.broadcast %68 : vector<1x256xi1> to vector<4x256xi1>
    %70 = vector.broadcast %cst_25 : f32 to vector<4x256xf32>
    %71 = arith.select %69, %65, %70 : vector<4x256xi1>, vector<4x256xf32>
    %c5 = arith.constant 5 : index
    %c0_26 = arith.constant 0 : index
    %c0_27 = arith.constant 0 : index
    %72 = vector.load %arg2[%c5, %c0_26, %c0_27] : memref<9x4x1xf32, #tpu.memory_space<vmem>>, vector<1x4x1xf32>
    %73 = vector.shape_cast %72 : vector<1x4x1xf32> to vector<4x1xf32>
    %74 = vector.broadcast %73 : vector<4x1xf32> to vector<4x256xf32>
    %75 = arith.mulf %71, %74 : vector<4x256xf32>
    %76 = arith.addf %64, %75 : vector<4x256xf32>
    %c241_i32 = arith.constant 241 : i32
    %77 = tpu.dynamic_rotate %1 by %c241_i32 dim 1 : vector<4x256xf32>, i32 -> vector<4x256xf32>
    %c240_i32 = arith.constant 240 : i32
    %78 = vector.broadcast %c240_i32 : i32 to vector<1x256xi32>
    %79 = arith.cmpi slt, %2, %78 : vector<1x256xi32>
    %c1_i32_28 = arith.constant 1 : i32
    %80 = vector.broadcast %c1_i32_28 : i32 to vector<1x256xi32>
    %81 = arith.cmpi sge, %4, %80 : vector<1x256xi32>
    %82 = arith.andi %79, %81 : vector<1x256xi1>
    %cst_29 = arith.constant 0.000000e+00 : f32
    %83 = vector.shape_cast %82 : vector<1x256xi1> to vector<1x256xi1>
    %84 = vector.broadcast %83 : vector<1x256xi1> to vector<4x256xi1>
    %85 = vector.broadcast %cst_29 : f32 to vector<4x256xf32>
    %86 = arith.select %84, %77, %85 : vector<4x256xi1>, vector<4x256xf32>
    %c6 = arith.constant 6 : index
    %c0_30 = arith.constant 0 : index
    %c0_31 = arith.constant 0 : index
    %87 = vector.load %arg2[%c6, %c0_30, %c0_31] : memref<9x4x1xf32, #tpu.memory_space<vmem>>, vector<1x4x1xf32>
    %88 = vector.shape_cast %87 : vector<1x4x1xf32> to vector<4x1xf32>
    %89 = vector.broadcast %88 : vector<4x1xf32> to vector<4x256xf32>
    %90 = arith.mulf %86, %89 : vector<4x256xf32>
    %91 = arith.addf %76, %90 : vector<4x256xf32>
    %c240_i32_32 = arith.constant 240 : i32
    %92 = tpu.dynamic_rotate %1 by %c240_i32_32 dim 1 : vector<4x256xf32>, i32 -> vector<4x256xf32>
    %c240_i32_33 = arith.constant 240 : i32
    %93 = vector.broadcast %c240_i32_33 : i32 to vector<1x256xi32>
    %94 = arith.cmpi slt, %2, %93 : vector<1x256xi32>
    %cst_34 = arith.constant 0.000000e+00 : f32
    %95 = vector.shape_cast %94 : vector<1x256xi1> to vector<1x256xi1>
    %96 = vector.broadcast %95 : vector<1x256xi1> to vector<4x256xi1>
    %97 = vector.broadcast %cst_34 : f32 to vector<4x256xf32>
    %98 = arith.select %96, %92, %97 : vector<4x256xi1>, vector<4x256xf32>
    %c7 = arith.constant 7 : index
    %c0_35 = arith.constant 0 : index
    %c0_36 = arith.constant 0 : index
    %99 = vector.load %arg2[%c7, %c0_35, %c0_36] : memref<9x4x1xf32, #tpu.memory_space<vmem>>, vector<1x4x1xf32>
    %100 = vector.shape_cast %99 : vector<1x4x1xf32> to vector<4x1xf32>
    %101 = vector.broadcast %100 : vector<4x1xf32> to vector<4x256xf32>
    %102 = arith.mulf %98, %101 : vector<4x256xf32>
    %103 = arith.addf %91, %102 : vector<4x256xf32>
    %c239_i32 = arith.constant 239 : i32
    %104 = tpu.dynamic_rotate %1 by %c239_i32 dim 1 : vector<4x256xf32>, i32 -> vector<4x256xf32>
    %c240_i32_37 = arith.constant 240 : i32
    %105 = vector.broadcast %c240_i32_37 : i32 to vector<1x256xi32>
    %106 = arith.cmpi slt, %2, %105 : vector<1x256xi32>
    %c15_i32_38 = arith.constant 15 : i32
    %107 = vector.broadcast %c15_i32_38 : i32 to vector<1x256xi32>
    %108 = arith.cmpi slt, %4, %107 : vector<1x256xi32>
    %109 = arith.andi %106, %108 : vector<1x256xi1>
    %cst_39 = arith.constant 0.000000e+00 : f32
    %110 = vector.shape_cast %109 : vector<1x256xi1> to vector<1x256xi1>
    %111 = vector.broadcast %110 : vector<1x256xi1> to vector<4x256xi1>
    %112 = vector.broadcast %cst_39 : f32 to vector<4x256xf32>
    %113 = arith.select %111, %104, %112 : vector<4x256xi1>, vector<4x256xf32>
    %c8 = arith.constant 8 : index
    %c0_40 = arith.constant 0 : index
    %c0_41 = arith.constant 0 : index
    %114 = vector.load %arg2[%c8, %c0_40, %c0_41] : memref<9x4x1xf32, #tpu.memory_space<vmem>>, vector<1x4x1xf32>
    %115 = vector.shape_cast %114 : vector<1x4x1xf32> to vector<4x1xf32>
    %116 = vector.broadcast %115 : vector<4x1xf32> to vector<4x256xf32>
    %117 = arith.mulf %113, %116 : vector<4x256xf32>
    %118 = arith.addf %103, %117 : vector<4x256xf32>
    %cst_42 = arith.constant 0.000000e+00 : f32
    %119 = vector.broadcast %cst_42 : f32 to vector<8x256xf32>
    %c0_43 = arith.constant 0 : index
    %c0_44 = arith.constant 0 : index
    %120 = vector.load %arg4[%c0_43, %c0_44] : memref<8x1xf32, #tpu.memory_space<vmem>>, vector<8x1xf32>
    %121 = vector.broadcast %120 : vector<8x1xf32> to vector<8x256xf32>
    %122 = arith.addf %119, %121 : vector<8x256xf32>
    %123 = vector.extract_strided_slice %118 {offsets = [0, 0], sizes = [1, 256], strides = [1, 1]} : vector<4x256xf32> to vector<1x256xf32>
    %c0_45 = arith.constant 0 : index
    %c0_46 = arith.constant 0 : index
    %c0_47 = arith.constant 0 : index
    %124 = vector.load %arg3[%c0_45, %c0_46, %c0_47] : memref<4x8x1xf32, #tpu.memory_space<vmem>>, vector<1x8x1xf32>
    %125 = vector.shape_cast %124 : vector<1x8x1xf32> to vector<8x1xf32>
    %126 = vector.broadcast %123 : vector<1x256xf32> to vector<8x256xf32>
    %127 = vector.broadcast %125 : vector<8x1xf32> to vector<8x256xf32>
    %128 = arith.mulf %126, %127 : vector<8x256xf32>
    %129 = arith.addf %122, %128 : vector<8x256xf32>
    %130 = vector.extract_strided_slice %118 {offsets = [1, 0], sizes = [1, 256], strides = [1, 1]} : vector<4x256xf32> to vector<1x256xf32>
    %c1_48 = arith.constant 1 : index
    %c0_49 = arith.constant 0 : index
    %c0_50 = arith.constant 0 : index
    %131 = vector.load %arg3[%c1_48, %c0_49, %c0_50] : memref<4x8x1xf32, #tpu.memory_space<vmem>>, vector<1x8x1xf32>
    %132 = vector.shape_cast %131 : vector<1x8x1xf32> to vector<8x1xf32>
    %133 = vector.broadcast %130 : vector<1x256xf32> to vector<8x256xf32>
    %134 = vector.broadcast %132 : vector<8x1xf32> to vector<8x256xf32>
    %135 = arith.mulf %133, %134 : vector<8x256xf32>
    %136 = arith.addf %129, %135 : vector<8x256xf32>
    %137 = vector.extract_strided_slice %118 {offsets = [2, 0], sizes = [1, 256], strides = [1, 1]} : vector<4x256xf32> to vector<1x256xf32>
    %c2_51 = arith.constant 2 : index
    %c0_52 = arith.constant 0 : index
    %c0_53 = arith.constant 0 : index
    %138 = vector.load %arg3[%c2_51, %c0_52, %c0_53] : memref<4x8x1xf32, #tpu.memory_space<vmem>>, vector<1x8x1xf32>
    %139 = vector.shape_cast %138 : vector<1x8x1xf32> to vector<8x1xf32>
    %140 = vector.broadcast %137 : vector<1x256xf32> to vector<8x256xf32>
    %141 = vector.broadcast %139 : vector<8x1xf32> to vector<8x256xf32>
    %142 = arith.mulf %140, %141 : vector<8x256xf32>
    %143 = arith.addf %136, %142 : vector<8x256xf32>
    %144 = vector.extract_strided_slice %118 {offsets = [3, 0], sizes = [1, 256], strides = [1, 1]} : vector<4x256xf32> to vector<1x256xf32>
    %c3_54 = arith.constant 3 : index
    %c0_55 = arith.constant 0 : index
    %c0_56 = arith.constant 0 : index
    %145 = vector.load %arg3[%c3_54, %c0_55, %c0_56] : memref<4x8x1xf32, #tpu.memory_space<vmem>>, vector<1x8x1xf32>
    %146 = vector.shape_cast %145 : vector<1x8x1xf32> to vector<8x1xf32>
    %147 = vector.broadcast %144 : vector<1x256xf32> to vector<8x256xf32>
    %148 = vector.broadcast %146 : vector<8x1xf32> to vector<8x256xf32>
    %149 = arith.mulf %147, %148 : vector<8x256xf32>
    %150 = arith.addf %143, %149 : vector<8x256xf32>
    %c0_57 = arith.constant 0 : index
    %c0_58 = arith.constant 0 : index
    %c0_59 = arith.constant 0 : index
    %151 = vector.load %arg5[%c0_57, %c0_58, %c0_59] : memref<1x8x256xf32, #tpu.memory_space<vmem>>, vector<1x8x256xf32>
    %152 = vector.shape_cast %151 : vector<1x8x256xf32> to vector<8x256xf32>
    %153 = vector.shape_cast %150 : vector<8x256xf32> to vector<1x8x256xf32>
    tpu.vector_store %arg5[%c0_57, %c0_58, %c0_59], %153 {strides = array<i32>} : memref<1x8x256xf32, #tpu.memory_space<vmem>>, vector<1x8x256xf32>,
    return
  }
  func.func @transform_0(%arg0: i32) -> (i32, i32, i32) {
    %c0_i32 = arith.constant 0 : i32
    %c0_i32_0 = arith.constant 0 : i32
    %c0_i32_1 = arith.constant 0 : i32
    return %arg0, %c0_i32, %c0_i32_0 : i32, i32, i32
  }
  func.func @transform_1(%arg0: i32) -> (i32, i32, i32) {
    %c0_i32 = arith.constant 0 : i32
    %c0_i32_0 = arith.constant 0 : i32
    %c0_i32_1 = arith.constant 0 : i32
    %c0_i32_2 = arith.constant 0 : i32
    return %c0_i32, %c0_i32_0, %c0_i32_1 : i32, i32, i32
  }
  func.func @transform_2(%arg0: i32) -> (i32, i32, i32) {
    %c0_i32 = arith.constant 0 : i32
    %c0_i32_0 = arith.constant 0 : i32
    %c0_i32_1 = arith.constant 0 : i32
    %c0_i32_2 = arith.constant 0 : i32
    return %c0_i32, %c0_i32_0, %c0_i32_1 : i32, i32, i32
  }
  func.func @transform_3(%arg0: i32) -> (i32, i32) {
    %c0_i32 = arith.constant 0 : i32
    %c0_i32_0 = arith.constant 0 : i32
    %c0_i32_1 = arith.constant 0 : i32
    return %c0_i32, %c0_i32_0 : i32, i32
  }
  func.func @transform_4(%arg0: i32) -> (i32, i32, i32) {
    %c0_i32 = arith.constant 0 : i32
    %c0_i32_0 = arith.constant 0 : i32
    %c0_i32_1 = arith.constant 0 : i32
    return %arg0, %c0_i32, %c0_i32_0 : i32, i32, i32
  }
}

</mosaic_0001>

<llo_original>
// kernel: tpu_custom_call.1
$region0: #{tpu_custom_call.1}
  #allocation0 [shape = 'u32[]', space=smem, size = 0x4, offset = 0x4, fixed_abs, tag = 'smem constant byte address 0x4 - core index']
  #allocation1 [shape = 'u32[72,128]{1,0:T(1,128)}', space=vmem, size = 0x9000, scoped, tag = 'internal scratch']
  %s0 = inlined_call_operand.vmem [shape: f32[2,4,256], index: 0, kind: input, shape index: {}]
  %s1 = inlined_call_operand.vmem [shape: f32[9,4,1], index: 1, kind: input, shape index: {}]
  %s2 = inlined_call_operand.vmem [shape: f32[4,8,1], index: 2, kind: input, shape index: {}]
  %s3 = inlined_call_operand.vmem [shape: f32[8,1], index: 3, kind: input, shape index: {}]
  %s4 = inlined_call_operand.hbm [shape: f32[2,8,256], index: 4, kind: output, shape index: {}]
  %s5 = sld [smem:[#allocation0]]
  $region49: #{tpu_custom_call.1} parent=0
    _
  %s7 = ssub.s32 1, %s5
  %s8 = scalar_select 0, %s7, %s5
  $region1: #{tpu_custom_call.1} parent=0
    #allocation2 [shape = 'u8[16384]{0}', space=vmem, size = 0x4000, scoped, tag = 'output window, operand 0']
    #allocation3 [shape = 's32[2]{0}', space=sflag, size = 0x8, scoped, tag = 'scoped memory for tpu_custom_call.1']
    %9 = vsyncpa [#allocation3], 0
    %s10 = scalar_lea.sflag [#allocation3], 1
    %11 = vsyncpa %s10, 0
    loop: start=0, step=1, limit=4
    $region2: #{tpu_custom_call.1} parent=1 // loop_pre_header
      _
    $region3: #{tpu_custom_call.1} parent=1 // loop_header
      %s13 = sphi 0, %s17
      %p14 = scmp.ge.s32.totalorder %s13, 4
      %s23 = sphi 0, %s25
      %s26 = sphi 0, %s23
      %s27 = sphi 0, %s26
      %s43 = sphi 0, %s27
      %s47 = sphi 0, %s47
      %s49 = sphi 0, %s47
      %s50 = sphi 0, %s49
      %s64 = sphi 0, %s50
      %s68 = sphi 0, %s68
      %s70 = sphi 0, %s68
      %s71 = sphi 0, %s70
      %s85 = sphi 0, %s71
      %s89 = sphi 0, %s89
      %s91 = sphi 0, %s89
      %s92 = sphi 0, %s91
      %s106 = sphi 0, %s92
      %s112 = sphi 0, %s114
      %s115 = sphi 0, %s112
      %s116 = sphi 0, %s115
      %s132 = sphi 0, %s116
    $region4: #{tpu_custom_call.1} parent=1 // loop_header_branch
      %16 = sbr.rel (%p14) target = $region8
    $region5: #{tpu_custom_call.1} parent=1 // loop_body
      %s18 = ssub.s32 %s13, 1
      %s19 = ssub.s32 %s13, 2
      %s20 = sadd.s32 %s13, 1
      %s21 = ssub.s32 %s13, %s20
      %p22 = scmp.eq.s32.totalorder %s21, 0
      %s24 = sadd.s32 %s23, 1
      %s25 = scalar_select %p22, %s23, %s24
      %p28 = pneg %p22
      %p29 = scmp.eq.s32.totalorder %s13, 1
      %p30 = por %p28, %p29
      %p31 = scmp.ne.s32.totalorder %s23, %s26
      %p32 = scmp.eq.s32.totalorder %s13, 0
      %p33 = por %p31, %p32
      %p34 = scmp.ne.s32.totalorder %s23, %s26
      %p35 = scmp.eq.s32.totalorder %s18, 1
      %p36 = por %p34, %p35
      %p37 = scmp.ne.s32.totalorder %s26, %s27
      %p38 = scmp.eq.s32.totalorder %s18, 0
      %p39 = por %p37, %p38
      %p40 = scmp.ne.s32.totalorder %s26, %s27
      %p41 = scmp.eq.s32.totalorder %s19, 1
      %p42 = por %p40, %p41
      %p44 = scmp.ne.s32.totalorder %s27, %s43
      %p45 = scmp.eq.s32.totalorder %s19, 0
      %p46 = por %p44, %p45
      %s48 = sadd.s32 %s47, 1
      %p51 = scmp.eq.s32.totalorder %s13, 1
      %p52 = scmp.ne.s32.totalorder %s47, %s49
      %p53 = scmp.eq.s32.totalorder %s13, 0
      %p54 = por %p52, %p53
      %p55 = scmp.ne.s32.totalorder %s47, %s49
      %p56 = scmp.eq.s32.totalorder %s18, 1
      %p57 = por %p55, %p56
      %p58 = scmp.ne.s32.totalorder %s49, %s50
      %p59 = scmp.eq.s32.totalorder %s18, 0
      %p60 = por %p58, %p59
      %p61 = scmp.ne.s32.totalorder %s49, %s50
      %p62 = scmp.eq.s32.totalorder %s19, 1
      %p63 = por %p61, %p62
      %p65 = scmp.ne.s32.totalorder %s50, %s64
      %p66 = scmp.eq.s32.totalorder %s19, 0
      %p67 = por %p65, %p66
      %s69 = sadd.s32 %s68, 1
      %p72 = scmp.eq.s32.totalorder %s13, 1
      %p73 = scmp.ne.s32.totalorder %s68, %s70
      %p74 = scmp.eq.s32.totalorder %s13, 0
      %p75 = por %p73, %p74
      %p76 = scmp.ne.s32.totalorder %s68, %s70
      %p77 = scmp.eq.s32.totalorder %s18, 1
      %p78 = por %p76, %p77
      %p79 = scmp.ne.s32.totalorder %s70, %s71
      %p80 = scmp.eq.s32.totalorder %s18, 0
      %p81 = por %p79, %p80
      %p82 = scmp.ne.s32.totalorder %s70, %s71
      %p83 = scmp.eq.s32.totalorder %s19, 1
      %p84 = por %p82, %p83
      %p86 = scmp.ne.s32.totalorder %s71, %s85
      %p87 = scmp.eq.s32.totalorder %s19, 0
      %p88 = por %p86, %p87
      %s90 = sadd.s32 %s89, 1
      %p93 = scmp.eq.s32.totalorder %s13, 1
      %p94 = scmp.ne.s32.totalorder %s89, %s91
      %p95 = scmp.eq.s32.totalorder %s13, 0
      %p96 = por %p94, %p95
      %p97 = scmp.ne.s32.totalorder %s89, %s91
      %p98 = scmp.eq.s32.totalorder %s18, 1
      %p99 = por %p97, %p98
      %p100 = scmp.ne.s32.totalorder %s91, %s92
      %p101 = scmp.eq.s32.totalorder %s18, 0
      %p102 = por %p100, %p101
      %p103 = scmp.ne.s32.totalorder %s91, %s92
      %p104 = scmp.eq.s32.totalorder %s19, 1
      %p105 = por %p103, %p104
      %p107 = scmp.ne.s32.totalorder %s92, %s106
      %p108 = scmp.eq.s32.totalorder %s19, 0
      %p109 = por %p107, %p108
      %s110 = ssub.s32 %s13, %s20
      %p111 = scmp.eq.s32.totalorder %s110, 0
      %s113 = sadd.s32 %s112, 1
      %s114 = scalar_select %p111, %s112, %s113
      %p117 = pneg %p111
      %p118 = scmp.eq.s32.totalorder %s13, 1
      %p119 = por %p117, %p118
      %p120 = scmp.ne.s32.totalorder %s112, %s115
      %p121 = scmp.eq.s32.totalorder %s13, 0
      %p122 = por %p120, %p121
      %p123 = scmp.ne.s32.totalorder %s112, %s115
      %p124 = scmp.eq.s32.totalorder %s18, 1
      %p125 = por %p123, %p124
      %p126 = scmp.ne.s32.totalorder %s115, %s116
      %p127 = scmp.eq.s32.totalorder %s18, 0
      %p128 = por %p126, %p127
      %p129 = scmp.ne.s32.totalorder %s115, %s116
      %p130 = scmp.eq.s32.totalorder %s19, 1
      %p131 = por %p129, %p130
      %p133 = scmp.ne.s32.totalorder %s116, %s132
      %p134 = scmp.eq.s32.totalorder %s19, 0
      %p135 = por %p133, %p134
      %p136 = scmp.le.s32.totalorder 1, %s13
      %p137 = scmp.lt.s32.totalorder %s13, 3
      %p138 = pnand %p136, %p137
      %p139 = pneg %p138
      // Predicated region
      $region9: #{tpu_custom_call.1} parent=5 // pred_check
        _
      $region10: #{tpu_custom_call.1} parent=5 // pred_check_branch
        %141 = sbr.rel (%p138) target = $region12
      $region11: #{tpu_custom_call.1} parent=5 // pred_region
        %s142 = ssub.s32 %s13, 1
        // Predicated region
        $region13: #{tpu_custom_call.1} parent=11 // pred_check
          %p143 = pneg %p60
        $region14: #{tpu_custom_call.1} parent=11 // pred_check_branch
          %145 = sbr.rel (%p143) target = $region16
        $region15: #{tpu_custom_call.1} parent=11 // pred_region
          _
        $region16: #{tpu_custom_call.1} parent=11 // pred_fallthru
          _
        // Predicated region
        $region17: #{tpu_custom_call.1} parent=11 // pred_check
          %p146 = pneg %p81
        $region18: #{tpu_custom_call.1} parent=11 // pred_check_branch
          %148 = sbr.rel (%p146) target = $region20
        $region19: #{tpu_custom_call.1} parent=11 // pred_region
          _
        $region20: #{tpu_custom_call.1} parent=11 // pred_fallthru
          _
        // Predicated region
        $region21: #{tpu_custom_call.1} parent=11 // pred_check
          %p149 = pneg %p102
        $region22: #{tpu_custom_call.1} parent=11 // pred_check_branch
          %151 = sbr.rel (%p149) target = $region24
        $region23: #{tpu_custom_call.1} parent=11 // pred_region
          _
        $region24: #{tpu_custom_call.1} parent=11 // pred_fallthru
          _
      $region12: #{tpu_custom_call.1} parent=5 // pred_fallthru
        _
      %p152 = scmp.lt.s32.totalorder %s13, 2
      // Predicated region
      $region25: #{tpu_custom_call.1} parent=5 // pred_check
        %p153 = pneg %p152
      $region26: #{tpu_custom_call.1} parent=5 // pred_check_branch
        %155 = sbr.rel (%p153) target = $region28
      $region27: #{tpu_custom_call.1} parent=5 // pred_region
        // Predicated region
        $region29: #{tpu_custom_call.1} parent=27 // pred_check
          %p156 = pneg %p33
        $region30: #{tpu_custom_call.1} parent=27 // pred_check_branch
          %158 = sbr.rel (%p156) target = $region32
        $region31: #{tpu_custom_call.1} parent=27 // pred_region
          %p159 = scmp.lt.s32.totalorder %s13, 1
          %s160 = scalar_select %p159, %s13, 1
          %s161 = smul.addr %s160, 2
          %s162 = smul.addr %s161, 4
          %s163 = scalar_lea.vmem %s0, %s162
        $region32: #{tpu_custom_call.1} parent=27 // pred_fallthru
          _
      $region28: #{tpu_custom_call.1} parent=5 // pred_fallthru
        _
      %p164 = scmp.le.s32.totalorder 1, %s13
      %p165 = scmp.lt.s32.totalorder %s13, 3
      %p166 = pnand %p164, %p165
      %p167 = pneg %p166
      // Predicated region
      $region33: #{tpu_custom_call.1} parent=5 // pred_check
        _
      $region34: #{tpu_custom_call.1} parent=5 // pred_check_branch
        %169 = sbr.rel (%p166) target = $region36
      $region35: #{tpu_custom_call.1} parent=5 // pred_region
        %s170 = ssub.s32 %s13, 1
        %p171 = scmp.lt.s32.totalorder %s18, 1
        %s172 = scalar_select %p171, %s18, 1
        %s173 = smul.addr %s172, 2
        %s174 = smul.addr %s173, 4
        %s175 = scalar_lea.vmem %s0, %s174
        %p176 = pneg %p39
        %p177 = pneg %p36
        %p178 = pneg %p60
        %p179 = pneg %p57
        %p180 = pneg %p81
        %p181 = pneg %p78
        %p182 = pneg %p102
        %p183 = pneg %p99
        %p184 = pneg %p128
        %p185 = pneg %p125
        %s186 = sand.u32 %s115, 1
        %s187 = scalar_lea.sflag [#allocation3], %s186
        %s188 = sand.u32 %s115, 1
        %s189 = smul.addr %s188, 16
        %s190 = scalar_lea.vmem [#allocation2], %s189
        %p191 = scmp.lt.s32.totalorder %s18, 1
        %s192 = scalar_select %p191, %s18, 1
        %s193 = smul.addr %s192, 2
        %s194 = smul.addr %s193, 4
        %s195 = scalar_lea.vmem %s0, %s194
        %v196 = vld [vmem:[%s195] sm:$0xff]
        %v197 = vlaneseq
        %v198 = vand.u32 %v197, 127
        %v199 = vadd.s32 %v198, 128
        %v200 = vand.u32 %v198, 15
        %v201 = vand.u32 %v199, 15
        %203 = vst [vmem:[#allocation1] ss:$2 sm:$0xff] %v196
        %v204 = vld.sshfl [vmem:[#allocation1] sm:$0xff pattern:$0x75316420]
        %v205 = vld.sshfl [vmem:[#allocation1 + $0x8] sm:$0xff pattern:$0x75316420]
        %208 = vrot.lane.b32.xlu0 %v204, 17
        %v209 = vpop.permute.xlu0 %208
        %210 = vrot.lane.b32.xlu0 %v205, 17
        %v211 = vpop.permute.xlu0 %210
        %vm212 = vcmp.lt.s32.totalorder %v198, 17
        %v213 = vsel %vm212, %v209, %v211
        %v214 = vsel %vm212, %v211, %v209
        %vm215 = vcmp.ge.s32.totalorder %v198, 16
        %vm216 = vcmp.ge.s32.totalorder %v199, 16
        %vm217 = vcmp.ge.s32.totalorder %v200, 1
        %vm218 = vcmp.ge.s32.totalorder %v201, 1
        %vm219 = vmand %vm215, %vm217
        %vm220 = vmand %vm216, %vm218
        %v221 = vsel %vm219, 1, 0
        %v222 = vsel %vm220, 1, 0
        %vm223 = vcmp.eq.s32.totalorder %v221, 1
        %vm224 = vcmp.eq.s32.totalorder %v222, 1
        %v225 = vsel %vm223, %v214, 0.0
        %v226 = vsel %vm224, %v213, 0.0
        %v227 = vld [vmem:[%s1] sm:$0xf]
        %229 = vset.pattern.permute.xlu0 0
        %230 = vperm.xlu0 %229, %v227
        %v231 = vpop.permute.xlu0 %230
        %v233 = vmul.f32 %v225, %v231
        %v234 = vmul.f32 %v226, %v231
        %v235 = vadd.f32 %v233, 0.0
        %v236 = vadd.f32 %v234, 0.0
        %237 = vst [vmem:[#allocation1] ss:$2 sm:$0xff] %v196
        %v238 = vld.sshfl [vmem:[#allocation1] sm:$0xff pattern:$0x75316420]
        %v239 = vld.sshfl [vmem:[#allocation1 + $0x8] sm:$0xff pattern:$0x75316420]
        %242 = vrot.lane.b32.xlu0 %v238, 16
        %v243 = vpop.permute.xlu0 %242
        %244 = vrot.lane.b32.xlu0 %v239, 16
        %v245 = vpop.permute.xlu0 %244
        %vm246 = vcmp.lt.s32.totalorder %v198, 16
        %v247 = vsel %vm246, %v243, %v245
        %v248 = vsel %vm246, %v245, %v243
        %v249 = vsel %vm215, 1, 0
        %v250 = vsel %vm216, 1, 0
        %vm251 = vcmp.eq.s32.totalorder %v249, 1
        %vm252 = vcmp.eq.s32.totalorder %v250, 1
        %v253 = vsel %vm251, %v248, 0.0
        %v254 = vsel %vm252, %v247, 0.0
        %s255 = scalar_lea.vmem %s1, 4
        %v256 = vld [vmem:[%s255] sm:$0xf]
        %258 = vset.pattern.permute.xlu0 0
        %259 = vperm.xlu0 %258, %v256
        %v260 = vpop.permute.xlu0 %259
        %v262 = vmul.f32 %v253, %v260
        %v263 = vmul.f32 %v254, %v260
        %v264 = vadd.f32 %v235, %v262
        %v265 = vadd.f32 %v236, %v263
        %266 = vst [vmem:[#allocation1] ss:$2 sm:$0xff] %v196
        %v267 = vld.sshfl [vmem:[#allocation1] sm:$0xff pattern:$0x75316420]
        %v268 = vld.sshfl [vmem:[#allocation1 + $0x8] sm:$0xff pattern:$0x75316420]
        %271 = vrot.lane.b32.xlu0 %v267, 15
        %v272 = vpop.permute.xlu0 %271
        %273 = vrot.lane.b32.xlu0 %v268, 15
        %v274 = vpop.permute.xlu0 %273
        %vm275 = vcmp.lt.s32.totalorder %v198, 15
        %v276 = vsel %vm275, %v272, %v274
        %v277 = vsel %vm275, %v274, %v272
        %vm278 = vcmp.lt.s32.totalorder %v200, 15
        %vm279 = vcmp.lt.s32.totalorder %v201, 15
        %vm280 = vmand %vm215, %vm278
        %vm281 = vmand %vm216, %vm279
        %v282 = vsel %vm280, 1, 0
        %v283 = vsel %vm281, 1, 0
        %vm284 = vcmp.eq.s32.totalorder %v282, 1
        %vm285 = vcmp.eq.s32.totalorder %v283, 1
        %v286 = vsel %vm284, %v277, 0.0
        %v287 = vsel %vm285, %v276, 0.0
        %s288 = scalar_lea.vmem %s1, 8
        %v289 = vld [vmem:[%s288] sm:$0xf]
        %291 = vset.pattern.permute.xlu0 0
        %292 = vperm.xlu0 %291, %v289
        %v293 = vpop.permute.xlu0 %292
        %v295 = vmul.f32 %v286, %v293
        %v296 = vmul.f32 %v287, %v293
        %v297 = vadd.f32 %v264, %v295
        %v298 = vadd.f32 %v265, %v296
        %299 = vst [vmem:[#allocation1] ss:$2 sm:$0xff] %v196
        %v300 = vld.sshfl [vmem:[#allocation1] sm:$0xff pattern:$0x75316420]
        %v301 = vld.sshfl [vmem:[#allocation1 + $0x8] sm:$0xff pattern:$0x75316420]
        %304 = vrot.lane.b32.xlu0 %v300, 1
        %v305 = vpop.permute.xlu0 %304
        %306 = vrot.lane.b32.xlu0 %v301, 1
        %v307 = vpop.permute.xlu0 %306
        %vm308 = vcmp.lt.s32.totalorder %v198, 1
        %v309 = vsel %vm308, %v305, %v307
        %v310 = vsel %vm308, %v307, %v305
        %v311 = vsel %vm217, 1, 0
        %v312 = vsel %vm218, 1, 0
        %vm313 = vcmp.eq.s32.totalorder %v311, 1
        %vm314 = vcmp.eq.s32.totalorder %v312, 1
        %v315 = vsel %vm313, %v310, 0.0
        %v316 = vsel %vm314, %v309, 0.0
        %s317 = scalar_lea.vmem %s1, 12
        %v318 = vld [vmem:[%s317] sm:$0xf]
        %320 = vset.pattern.permute.xlu0 0
        %321 = vperm.xlu0 %320, %v318
        %v322 = vpop.permute.xlu0 %321
        %v324 = vmul.f32 %v315, %v322
        %v325 = vmul.f32 %v316, %v322
        %v326 = vadd.f32 %v297, %v324
        %v327 = vadd.f32 %v298, %v325
        %s328 = scalar_lea.vmem %s1, 16
        %v329 = vld [vmem:[%s328] sm:$0xf]
        %331 = vset.pattern.permute.xlu0 0
        %332 = vperm.xlu0 %331, %v329
        %v333 = vpop.permute.xlu0 %332
        %v335 = vunpack.c.l.s4 839922192
        %v336 = vunpack.c.0.s8 %v335
        %v337 = vperm.slane %v333, %v336
        %v339 = vmul.f32 %v196, %v337
        %341 = vst [vmem:[#allocation1] ss:$2 sm:$0xff] %v339
        %v342 = vld.sshfl [vmem:[#allocation1] sm:$0xff pattern:$0x75316420]
        %v343 = vld.sshfl [vmem:[#allocation1 + $0x8] sm:$0xff pattern:$0x75316420]
        %v346 = vadd.f32 %v326, %v342
        %v347 = vadd.f32 %v327, %v343
        %348 = vst [vmem:[#allocation1] ss:$2 sm:$0xff] %v196
        %v349 = vld.sshfl [vmem:[#allocation1] sm:$0xff pattern:$0x75316420]
        %v350 = vld.sshfl [vmem:[#allocation1 + $0x8] sm:$0xff pattern:$0x75316420]
        %353 = vrot.lane.b32.xlu0 %v349, 127
        %v354 = vpop.permute.xlu0 %353
        %355 = vrot.lane.b32.xlu0 %v350, 127
        %v356 = vpop.permute.xlu0 %355
        %vm357 = vcmp.lt.s32.totalorder %v198, 127
        %v358 = vsel %vm357, %v354, %v356
        %v359 = vsel %vm357, %v356, %v354
        %v360 = vsel %vm278, 1, 0
        %v361 = vsel %vm279, 1, 0
        %vm362 = vcmp.eq.s32.totalorder %v360, 1
        %vm363 = vcmp.eq.s32.totalorder %v361, 1
        %v364 = vsel %vm362, %v358, 0.0
        %v365 = vsel %vm363, %v359, 0.0
        %s366 = scalar_lea.vmem %s1, 20
        %v367 = vld [vmem:[%s366] sm:$0xf]
        %369 = vset.pattern.permute.xlu0 0
        %370 = vperm.xlu0 %369, %v367
        %v371 = vpop.permute.xlu0 %370
        %v373 = vmul.f32 %v364, %v371
        %v374 = vmul.f32 %v365, %v371
        %v375 = vadd.f32 %v346, %v373
        %v376 = vadd.f32 %v347, %v374
        %377 = vst [vmem:[#allocation1] ss:$2 sm:$0xff] %v196
        %v378 = vld.sshfl [vmem:[#allocation1] sm:$0xff pattern:$0x75316420]
        %v379 = vld.sshfl [vmem:[#allocation1 + $0x8] sm:$0xff pattern:$0x75316420]
        %382 = vrot.lane.b32.xlu0 %v378, 113
        %v383 = vpop.permute.xlu0 %382
        %384 = vrot.lane.b32.xlu0 %v379, 113
        %v385 = vpop.permute.xlu0 %384
        %vm386 = vcmp.lt.s32.totalorder %v198, 113
        %v387 = vsel %vm386, %v383, %v385
        %v388 = vsel %vm386, %v385, %v383
        %vm389 = vcmp.lt.s32.totalorder %v198, 240
        %vm390 = vcmp.lt.s32.totalorder %v199, 240
        %vm391 = vmand %vm389, %vm217
        %vm392 = vmand %vm390, %vm218
        %v393 = vsel %vm391, 1, 0
        %v394 = vsel %vm392, 1, 0
        %vm395 = vcmp.eq.s32.totalorder %v393, 1
        %vm396 = vcmp.eq.s32.totalorder %v394, 1
        %v397 = vsel %vm395, %v387, 0.0
        %v398 = vsel %vm396, %v388, 0.0
        %s399 = scalar_lea.vmem %s1, 24
        %v400 = vld [vmem:[%s399] sm:$0xf]
        %402 = vset.pattern.permute.xlu0 0
        %403 = vperm.xlu0 %402, %v400
        %v404 = vpop.permute.xlu0 %403
        %v406 = vmul.f32 %v397, %v404
        %v407 = vmul.f32 %v398, %v404
        %v408 = vadd.f32 %v375, %v406
        %v409 = vadd.f32 %v376, %v407
        %410 = vst [vmem:[#allocation1] ss:$2 sm:$0xff] %v196
        %v411 = vld.sshfl [vmem:[#allocation1] sm:$0xff pattern:$0x75316420]
        %v412 = vld.sshfl [vmem:[#allocation1 + $0x8] sm:$0xff pattern:$0x75316420]
        %415 = vrot.lane.b32.xlu0 %v411, 112
        %v416 = vpop.permute.xlu0 %415
        %417 = vrot.lane.b32.xlu0 %v412, 112
        %v418 = vpop.permute.xlu0 %417
        %vm419 = vcmp.lt.s32.totalorder %v198, 112
        %v420 = vsel %vm419, %v416, %v418
        %v421 = vsel %vm419, %v418, %v416
        %v422 = vsel %vm389, 1, 0
        %v423 = vsel %vm390, 1, 0
        %vm424 = vcmp.eq.s32.totalorder %v422, 1
        %vm425 = vcmp.eq.s32.totalorder %v423, 1
        %v426 = vsel %vm424, %v420, 0.0
        %v427 = vsel %vm425, %v421, 0.0
        %s428 = scalar_lea.vmem %s1, 28
        %v429 = vld [vmem:[%s428] sm:$0xf]
        %431 = vset.pattern.permute.xlu0 0
        %432 = vperm.xlu0 %431, %v429
        %v433 = vpop.permute.xlu0 %432
        %v435 = vmul.f32 %v426, %v433
        %v436 = vmul.f32 %v427, %v433
        %v437 = vadd.f32 %v408, %v435
        %v438 = vadd.f32 %v409, %v436
        %439 = vst [vmem:[#allocation1] ss:$2 sm:$0xff] %v196
        %v440 = vld.sshfl [vmem:[#allocation1] sm:$0xff pattern:$0x75316420]
        %v441 = vld.sshfl [vmem:[#allocation1 + $0x8] sm:$0xff pattern:$0x75316420]
        %444 = vrot.lane.b32.xlu0 %v440, 111
        %v445 = vpop.permute.xlu0 %444
        %446 = vrot.lane.b32.xlu0 %v441, 111
        %v447 = vpop.permute.xlu0 %446
        %vm448 = vcmp.lt.s32.totalorder %v198, 111
        %v449 = vsel %vm448, %v445, %v447
        %v450 = vsel %vm448, %v447, %v445
        %vm451 = vmand %vm389, %vm278
        %vm452 = vmand %vm390, %vm279
        %v453 = vsel %vm451, 1, 0
        %v454 = vsel %vm452, 1, 0
        %vm455 = vcmp.eq.s32.totalorder %v453, 1
        %vm456 = vcmp.eq.s32.totalorder %v454, 1
        %v457 = vsel %vm455, %v449, 0.0
        %v458 = vsel %vm456, %v450, 0.0
        %s459 = scalar_lea.vmem %s1, 32
        %v460 = vld [vmem:[%s459] sm:$0xf]
        %462 = vset.pattern.permute.xlu0 0
        %463 = vperm.xlu0 %462, %v460
        %v464 = vpop.permute.xlu0 %463
        %v466 = vmul.f32 %v457, %v464
        %v467 = vmul.f32 %v458, %v464
        %v468 = vadd.f32 %v437, %v466
        %v469 = vadd.f32 %v438, %v467
        %v470 = vld [vmem:[%s3] sm:$0xff]
        %472 = vset.pattern.permute.xlu0 0
        %473 = vperm.xlu0 %472, %v470
        %v474 = vpop.permute.xlu0 %473
        %v476 = vadd.f32 %v474, 0.0
        %v477 = vld [vmem:[%s2] sm:$0xff]
        %v478 = vperm.slane %v468, 0
        %v479 = vperm.slane %v469, 0
        %481 = vset.pattern.permute.xlu0 0
        %482 = vperm.xlu0 %481, %v477
        %v483 = vpop.permute.xlu0 %482
        %v485 = vmul.f32 %v478, %v483
        %v486 = vmul.f32 %v479, %v483
        %v487 = vadd.f32 %v476, %v485
        %v488 = vadd.f32 %v476, %v486
        %s489 = scalar_lea.vmem %s2, 8
        %v490 = vld [vmem:[%s489] sm:$0xff]
        %v491 = vperm.slane %v468, 1
        %v492 = vperm.slane %v469, 1
        %494 = vset.pattern.permute.xlu0 0
        %495 = vperm.xlu0 %494, %v490
        %v496 = vpop.permute.xlu0 %495
        %v498 = vmul.f32 %v491, %v496
        %v499 = vmul.f32 %v492, %v496
        %v500 = vadd.f32 %v487, %v498
        %v501 = vadd.f32 %v488, %v499
        %s502 = scalar_lea.vmem %s2, 16
        %v503 = vld [vmem:[%s502] sm:$0xff]
        %v504 = vperm.slane %v468, 2
        %v505 = vperm.slane %v469, 2
        %507 = vset.pattern.permute.xlu0 0
        %508 = vperm.xlu0 %507, %v503
        %v509 = vpop.permute.xlu0 %508
        %v511 = vmul.f32 %v504, %v509
        %v512 = vmul.f32 %v505, %v509
        %v513 = vadd.f32 %v500, %v511
        %v514 = vadd.f32 %v501, %v512
        %s515 = scalar_lea.vmem %s2, 24
        %v516 = vld [vmem:[%s515] sm:$0xff]
        %v517 = vperm.slane %v468, 3
        %v518 = vperm.slane %v469, 3
        %520 = vset.pattern.permute.xlu0 0
        %521 = vperm.xlu0 %520, %v516
        %v522 = vpop.permute.xlu0 %521
        %v524 = vmul.f32 %v517, %v522
        %v525 = vmul.f32 %v518, %v522
        %v526 = vadd.f32 %v513, %v524
        %v527 = vadd.f32 %v514, %v525
        %528 = vst [vmem:[%s190] sm:$0xff] %v526
        %529 = vst [vmem:[%s190 + $0x8] sm:$0xff] %v527
        %s530 = sand.u32 %s115, 1
        %s531 = scalar_lea.sflag [#allocation3], %s530
        %s532 = sand.u32 %s115, 1
        %s533 = smul.addr %s532, 16
        %s534 = scalar_lea.vmem [#allocation2], %s533
        // Predicated region
        $region37: #{tpu_custom_call.1} parent=35 // pred_check
          %p535 = pneg %p125
        $region38: #{tpu_custom_call.1} parent=35 // pred_check_branch
          %537 = sbr.rel (%p535) target = $region40
        $region39: #{tpu_custom_call.1} parent=35 // pred_region
          %539 = vsyncadd %s531, 0
          %s540 = smul.addr %s18, 2
          %s541 = smul.addr %s540, 8
          %s542 = scalar_lea.hbm %s4, %s541
          %s544 = sshll.u32 %s534, 4
          %s545 = int_to_ptr.vmem [resolvable:$true] %s544
          %s546 = sshll.u32 %s542, 4
          %s547 = int_to_ptr.hbm [resolvable:$true] %s546
          %549 = dma.vmem_to_hbm [thread:$0]  %s545, 256, %s547, %s531
        $region40: #{tpu_custom_call.1} parent=35 // pred_fallthru
          _
      $region36: #{tpu_custom_call.1} parent=5 // pred_fallthru
        _
      %p550 = scmp.le.s32.totalorder 2, %s13
      // Predicated region
      $region41: #{tpu_custom_call.1} parent=5 // pred_check
        %p551 = pneg %p550
      $region42: #{tpu_custom_call.1} parent=5 // pred_check_branch
        %553 = sbr.rel (%p551) target = $region44
      $region43: #{tpu_custom_call.1} parent=5 // pred_region
        %s554 = ssub.s32 %s13, 2
        // Predicated region
        $region45: #{tpu_custom_call.1} parent=43 // pred_check
          %p555 = pneg %p131
        $region46: #{tpu_custom_call.1} parent=43 // pred_check_branch
          %557 = sbr.rel (%p555) target = $region48
        $region47: #{tpu_custom_call.1} parent=43 // pred_region
          %s558 = sand.u32 %s116, 1
          %s559 = scalar_lea.sflag [#allocation3], %s558
          %s560 = sand.u32 %s116, 1
          %s561 = smul.addr %s560, 16
          %s562 = scalar_lea.vmem [#allocation2], %s561
          %564 = dma.done %s559, 256
        $region48: #{tpu_custom_call.1} parent=43 // pred_fallthru
          _
      $region44: #{tpu_custom_call.1} parent=5 // pred_fallthru
        _
    $region6: #{tpu_custom_call.1} parent=1 // loop_footer
      %s17 = sadd.s32 1, %s13
    $region7: #{tpu_custom_call.1} parent=1 // loop_footer_branch
      %12 = sbr.rel target = $region3
    $region8: #{tpu_custom_call.1} parent=1 // loop_exit
      _
    %565 = vsyncpa [#allocation3], 1
    %s566 = scalar_lea.sflag [#allocation3], 1
    %567 = vsyncpa %s566, 1

</llo_original>
